<compile_context>
chip_gen: v6e
topology: v6e:2x2x1
jax: 0.10.0
libtpu: 0.0.40
codegen_flags: <defaults>
</compile_context>

<pallas_src>
import numpy as np
import jax
import jax.numpy as jnp
from jax.experimental import pallas as pl
from jax.experimental.pallas import tpu as pltpu


# 3x3 tap order with the center tap first (residual branch reads lanes [0, Cin)).
_TAPS = ((1, 1),) + tuple(
    (dh, dw) for dh in range(3) for dw in range(3) if (dh, dw) != (1, 1))


def _make_kernel(TH, W, Wo, Cin, K9, Cpad):
    R = 2 * TH * W  # full-resolution rows covered by one block (2*TH image rows)

    def kernel(xcol_ref, w1_ref, b1_ref, wm_ref, bm_ref, out_ref, h_scr):
        # xcol_ref: (1, 2*TH, W, K9)  bf16 im2col tile (center tap first)
        # w1_ref  : (K9, Cpad)        bf16 3x3 conv weights (Cout zero-padded)
        # b1_ref  : (1, Cpad)         f32
        # wm_ref  : (Cin, Cpad)       bf16 1x1 mixin conv weights
        # bm_ref  : (1, Cpad)         f32
        # out_ref : (1, TH*Wo, Cpad)  f32
        # h_scr   : (TH, W, Cpad)     f32 scratch for the width-pool stage
        xc = xcol_ref[0].reshape(R, K9)                       # bf16 (R, K9)

        # 3x3 conv (pad=1) as a single K=9*Cin MXU matmul, f32 accumulation.
        conv = jnp.dot(xc, w1_ref[...], preferred_element_type=jnp.float32)
        h = jnp.maximum(conv + b1_ref[...], 0.0)              # bias + ReLU (f32)

        # Residual 1x1 conv on the center tap (lanes [0, Cin) of xc).
        res = jnp.dot(xc[:, :Cin], wm_ref[...],
                      preferred_element_type=jnp.float32)

        # Fused branch sum at full resolution, pooled once (exact):
        #   pool(ReLU(conv)+x@Wm) == pool(ReLU(conv)) + pool(x)@Wm
        y = h + res                                           # (R, Cpad) f32

        # 2x2 average pool on the VPU — no pooling matmul, no (HW/4, HW) matrix.
        y4 = y.reshape(TH, 2, W, Cpad)                        # split image rows
        h_scr[...] = y4[:, 0, :, :] + y4[:, 1, :, :]          # sum height pairs
        pooled = (h_scr[:, pl.ds(0, Wo, stride=2), :] +       # sum width pairs
                  h_scr[:, pl.ds(1, Wo, stride=2), :]) * 0.25
        out_ref[0] = pooled.reshape(TH * Wo, Cpad) + bm_ref[...]

    return kernel


def _pick_block_out_rows(Ho, Wo):
    """Largest divisor of Ho (<=32) keeping the output block sublane-aligned."""
    for th in range(min(Ho, 32), 0, -1):
        if Ho % th == 0 and ((th * Wo) % 8 == 0 or th == Ho):
            return th
    return Ho


def d_residual_block(x_nchw, w1, b1, wm, bm, *, block_out_rows=None):
    """x: (N, Cin, H, W); w1: (Cout, Cin, 3, 3); wm: (Cout, Cin, 1, 1)."""
    N, Cin, H, W = x_nchw.shape
    Cout = w1.shape[0]
    assert H % 2 == 0 and W % 2 == 0
    Ho, Wo = H // 2, W // 2
    K9 = 9 * Cin
    Cpad = ((Cout + 127) // 128) * 128    # lane-dense output channels

    TH = block_out_rows if block_out_rows is not None else _pick_block_out_rows(Ho, Wo)
    assert Ho % TH == 0, "block_out_rows must divide Ho"

    # ---- wrapper-side glue (layout only) ----
    x_nhwc = jnp.transpose(x_nchw, (0, 2, 3, 1)).astype(jnp.float32)
    xpad = jnp.pad(x_nhwc, ((0, 0), (1, 1), (1, 1), (0, 0)))
    # im2col: (N, H, W, 9*Cin), center tap first, bf16 for the MXU.
    xcol = jnp.concatenate(
        [xpad[:, dh:dh + H, dw:dw + W, :] for dh, dw in _TAPS],
        axis=-1).astype(jnp.bfloat16)

    w1_k = jnp.concatenate(
        [jnp.transpose(w1[:, :, dh, dw], (1, 0)) for dh, dw in _TAPS], axis=0)
    w1_k = jnp.pad(w1_k, ((0, 0), (0, Cpad - Cout))).astype(jnp.bfloat16)
    wm_k = jnp.pad(jnp.transpose(wm[:, :, 0, 0], (1, 0)),
                   ((0, 0), (0, Cpad - Cout))).astype(jnp.bfloat16)
    b1_k = jnp.pad(b1.astype(jnp.float32), (0, Cpad - Cout)).reshape(1, Cpad)
    bm_k = jnp.pad(bm.astype(jnp.float32), (0, Cpad - Cout)).reshape(1, Cpad)

    kernel = _make_kernel(TH, W, Wo, Cin, K9, Cpad)
    out_flat = pl.pallas_call(
        kernel,
        out_shape=jax.ShapeDtypeStruct((N, Ho * Wo, Cpad), jnp.float32),
        grid_spec=pltpu.PrefetchScalarGridSpec(
            num_scalar_prefetch=0,
            grid=(N, Ho // TH),
            in_specs=[
                pl.BlockSpec((1, 2 * TH, W, K9), lambda n, r: (n, r, 0, 0)),
                pl.BlockSpec((K9, Cpad), lambda n, r: (0, 0)),
                pl.BlockSpec((1, Cpad), lambda n, r: (0, 0)),
                pl.BlockSpec((Cin, Cpad), lambda n, r: (0, 0)),
                pl.BlockSpec((1, Cpad), lambda n, r: (0, 0)),
            ],
            out_specs=pl.BlockSpec((1, TH * Wo, Cpad), lambda n, r: (n, r, 0)),
            scratch_shapes=[pltpu.VMEM((TH, W, Cpad), jnp.float32)],
        ),
        compiler_params=pltpu.CompilerParams(
            dimension_semantics=("parallel", "parallel")),
    )(xcol, w1_k, b1_k, wm_k, bm_k)

    out_nhwc = out_flat[:, :, :Cout].reshape(N, Ho, Wo, Cout)
    return jnp.transpose(out_nhwc, (0, 3, 1, 2))  # back to NCHW


def reference(x, w1, b1, wm, bm):
    """Pure-JAX (XLA, f32-HIGHEST) reference matching the PyTorch forward."""
    prec = jax.lax.Precision.HIGHEST
    h = jax.lax.conv_general_dilated(
        x, w1, window_strides=(1, 1), padding=((1, 1), (1, 1)),
        dimension_numbers=("NCHW", "OIHW", "NCHW"), precision=prec)
    h = jnp.maximum(h + b1[None, :, None, None], 0.0)
    N, C, H, W = h.shape
    h = h.reshape(N, C, H // 2, 2, W // 2, 2).mean(axis=(3, 5))
    xd = x.reshape(x.shape[0], x.shape[1], H // 2, 2, W // 2, 2).mean(axis=(3, 5))
    res = jax.lax.conv_general_dilated(
        xd, wm, window_strides=(1, 1), padding=((0, 0), (0, 0)),
        dimension_numbers=("NCHW", "OIHW", "NCHW"), precision=prec)
    return h + res + bm[None, :, None, None]


if __name__ == "__main__":
    N, Cin, Cout, H, W = 2, 4, 8, 16, 16
    key = jax.random.PRNGKey(0)
    kx, k1, kb1, km, kbm = jax.random.split(key, 5)

    x = jax.random.normal(kx, (N, Cin, H, W), jnp.float32)
    # TODO(synk): nn.utils.spectral_norm is a training-time weight
    # reparametrization (W / sigma via power iteration); deterministic weights
    # are used directly here instead of replaying the power iteration.
    w1 = jax.random.normal(k1, (Cout, Cin, 3, 3), jnp.float32) * 0.1
    b1 = jax.random.normal(kb1, (Cout,), jnp.float32) * 0.1
    wm = jax.random.normal(km, (Cout, Cin, 1, 1), jnp.float32) * 0.1
    bm = jax.random.normal(kbm, (Cout,), jnp.float32) * 0.1

    # The kernel runs its matmuls in bf16 (f32 accumulate); compare against an
    # f32 reference evaluated on bf16-rounded inputs for a tight check.
    xr = x.astype(jnp.bfloat16).astype(jnp.float32)
    w1r = w1.astype(jnp.bfloat16).astype(jnp.float32)
    wmr = wm.astype(jnp.bfloat16).astype(jnp.float32)
    ref = reference(xr, w1r, b1, wmr, bm)

    for rows in (4, None):  # multi-block spatial grid and default single block
        out = jax.block_until_ready(
            d_residual_block(x, w1, b1, wm, bm, block_out_rows=rows))
        np.testing.assert_allclose(np.asarray(out), np.asarray(ref),
                                   rtol=1e-3, atol=1e-3)

    print("KERNEL_OK")
</pallas_src>

<mosaic_0001>
module attributes {stable_mosaic.version = 11 : i64} {
  func.func @kernel(%arg0: i32, %arg1: i32, %arg2: memref<1x8x16x36xbf16, #tpu.memory_space<vmem>>, %arg3: memref<36x128xbf16, #tpu.memory_space<vmem>>, %arg4: memref<1x128xf32, #tpu.memory_space<vmem>>, %arg5: memref<4x128xbf16, #tpu.memory_space<vmem>>, %arg6: memref<1x128xf32, #tpu.memory_space<vmem>>, %arg7: memref<1x32x128xf32, #tpu.memory_space<vmem>>, %arg8: memref<4x16x128xf32, #tpu.memory_space<vmem>>) attributes {dimension_semantics = [#tpu.dimension_semantics<parallel>, #tpu.dimension_semantics<parallel>], iteration_bounds = array<i64: 2, 2>, scalar_prefetch = 0 : i64, scratch_operands = 1 : i64, tpu.core_type = #tpu.core_type<tc>, window_params = [{transform_indices = @transform_0, window_bounds = array<i64: 1, 8, 16, 36>}, {pipeline_mode = #tpu.pipeline_mode<synchronous>, transform_indices = @transform_1, window_bounds = array<i64: 36, 128>}, {pipeline_mode = #tpu.pipeline_mode<synchronous>, transform_indices = @transform_2, window_bounds = array<i64: 1, 128>}, {pipeline_mode = #tpu.pipeline_mode<synchronous>, transform_indices = @transform_3, window_bounds = array<i64: 4, 128>}, {pipeline_mode = #tpu.pipeline_mode<synchronous>, transform_indices = @transform_4, window_bounds = array<i64: 1, 128>}, {transform_indices = @transform_5, window_bounds = array<i64: 1, 32, 128>}]} {
    %c0 = arith.constant 0 : index
    %c0_0 = arith.constant 0 : index
    %c0_1 = arith.constant 0 : index
    %c0_2 = arith.constant 0 : index
    %0 = vector.load %arg2[%c0, %c0_0, %c0_1, %c0_2] : memref<1x8x16x36xbf16, #tpu.memory_space<vmem>>, vector<1x8x16x36xbf16>
    %1 = vector.shape_cast %0 : vector<1x8x16x36xbf16> to vector<8x16x36xbf16>
    %2 = vector.shape_cast %1 : vector<8x16x36xbf16> to vector<128x36xbf16>
    %c0_3 = arith.constant 0 : index
    %c0_4 = arith.constant 0 : index
    %3 = vector.load %arg3[%c0_3, %c0_4] : memref<36x128xbf16, #tpu.memory_space<vmem>>, vector<36x128xbf16>
    %cst = arith.constant dense<0.000000e+00> : vector<128x128xf32>
    %4 = tpu.matmul %2, %3, %cst {dimension_numbers = #tpu.dot_dimension_numbers<[1], [0], [0], [1], [0, 0, 1, 1], [], []>} : vector<128x36xbf16>, vector<36x128xbf16>, vector<128x128xf32> -> vector<128x128xf32>
    %c0_5 = arith.constant 0 : index
    %c0_6 = arith.constant 0 : index
    %5 = vector.load %arg4[%c0_5, %c0_6] : memref<1x128xf32, #tpu.memory_space<vmem>>, vector<1x128xf32>
    %6 = vector.broadcast %5 : vector<1x128xf32> to vector<128x128xf32>
    %7 = arith.addf %4, %6 : vector<128x128xf32>
    %cst_7 = arith.constant 0.000000e+00 : f32
    %8 = vector.broadcast %cst_7 : f32 to vector<128x128xf32>
    %9 = arith.maximumf %7, %8 : vector<128x128xf32>
    %10 = vector.extract_strided_slice %2 {offsets = [0, 0], sizes = [128, 4], strides = [1, 1]} : vector<128x36xbf16> to vector<128x4xbf16>
    %c0_8 = arith.constant 0 : index
    %c0_9 = arith.constant 0 : index
    %11 = vector.load %arg5[%c0_8, %c0_9] : memref<4x128xbf16, #tpu.memory_space<vmem>>, vector<4x128xbf16>
    %cst_10 = arith.constant dense<0.000000e+00> : vector<128x128xf32>
    %12 = tpu.matmul %10, %11, %cst_10 {dimension_numbers = #tpu.dot_dimension_numbers<[1], [0], [0], [1], [0, 0, 1, 1], [], []>} : vector<128x4xbf16>, vector<4x128xbf16>, vector<128x128xf32> -> vector<128x128xf32>
    %13 = arith.addf %9, %12 : vector<128x128xf32>
    %14 = vector.shape_cast %13 : vector<128x128xf32> to vector<4x2x16x128xf32>
    %15 = vector.extract_strided_slice %14 {offsets = [0, 0, 0, 0], sizes = [4, 1, 16, 128], strides = [1, 1, 1, 1]} : vector<4x2x16x128xf32> to vector<4x1x16x128xf32>
    %16 = vector.shape_cast %15 : vector<4x1x16x128xf32> to vector<4x16x128xf32>
    %17 = vector.extract_strided_slice %14 {offsets = [0, 1, 0, 0], sizes = [4, 1, 16, 128], strides = [1, 1, 1, 1]} : vector<4x2x16x128xf32> to vector<4x1x16x128xf32>
    %18 = vector.shape_cast %17 : vector<4x1x16x128xf32> to vector<4x16x128xf32>
    %19 = arith.addf %16, %18 : vector<4x16x128xf32>
    %c0_11 = arith.constant 0 : index
    %c0_12 = arith.constant 0 : index
    %c0_13 = arith.constant 0 : index
    %20 = vector.load %arg8[%c0_11, %c0_12, %c0_13] : memref<4x16x128xf32, #tpu.memory_space<vmem>>, vector<4x16x128xf32>
    tpu.vector_store %arg8[%c0_11, %c0_12, %c0_13], %19 {strides = array<i32>} : memref<4x16x128xf32, #tpu.memory_space<vmem>>, vector<4x16x128xf32>,
    %c0_14 = arith.constant 0 : index
    %c0_15 = arith.constant 0 : index
    %c0_16 = arith.constant 0 : index
    %21 = tpu.strided_load %arg8[%c0_14, %c0_15, %c0_16] {strides = array<i32: 1, 2, 1>} : memref<4x16x128xf32, #tpu.memory_space<vmem>>, vector<4x8x128xf32>
    %c0_17 = arith.constant 0 : index
    %c1 = arith.constant 1 : index
    %c0_18 = arith.constant 0 : index
    %22 = tpu.strided_load %arg8[%c0_17, %c1, %c0_18] {strides = array<i32: 1, 2, 1>} : memref<4x16x128xf32, #tpu.memory_space<vmem>>, vector<4x8x128xf32>
    %23 = arith.addf %21, %22 : vector<4x8x128xf32>
    %cst_19 = arith.constant 2.500000e-01 : f32
    %24 = vector.broadcast %cst_19 : f32 to vector<4x8x128xf32>
    %25 = arith.mulf %23, %24 : vector<4x8x128xf32>
    %26 = vector.shape_cast %25 : vector<4x8x128xf32> to vector<32x128xf32>
    %c0_20 = arith.constant 0 : index
    %c0_21 = arith.constant 0 : index
    %27 = vector.load %arg6[%c0_20, %c0_21] : memref<1x128xf32, #tpu.memory_space<vmem>>, vector<1x128xf32>
    %28 = vector.broadcast %27 : vector<1x128xf32> to vector<32x128xf32>
    %29 = arith.addf %26, %28 : vector<32x128xf32>
    %c0_22 = arith.constant 0 : index
    %c0_23 = arith.constant 0 : index
    %c0_24 = arith.constant 0 : index
    %30 = vector.load %arg7[%c0_22, %c0_23, %c0_24] : memref<1x32x128xf32, #tpu.memory_space<vmem>>, vector<1x32x128xf32>
    %31 = vector.shape_cast %30 : vector<1x32x128xf32> to vector<32x128xf32>
    %32 = vector.shape_cast %29 : vector<32x128xf32> to vector<1x32x128xf32>
    tpu.vector_store %arg7[%c0_22, %c0_23, %c0_24], %32 {strides = array<i32>} : memref<1x32x128xf32, #tpu.memory_space<vmem>>, vector<1x32x128xf32>,
    return
  }
  func.func @transform_0(%arg0: i32, %arg1: i32) -> (i32, i32, i32, i32) {
    %c0_i32 = arith.constant 0 : i32
    %c0_i32_0 = arith.constant 0 : i32
    %c0_i32_1 = arith.constant 0 : i32
    return %arg0, %arg1, %c0_i32, %c0_i32_0 : i32, i32, i32, i32
  }
  func.func @transform_1(%arg0: i32, %arg1: i32) -> (i32, i32) {
    %c0_i32 = arith.constant 0 : i32
    %c0_i32_0 = arith.constant 0 : i32
    %c0_i32_1 = arith.constant 0 : i32
    return %c0_i32, %c0_i32_0 : i32, i32
  }
  func.func @transform_2(%arg0: i32, %arg1: i32) -> (i32, i32) {
    %c0_i32 = arith.constant 0 : i32
    %c0_i32_0 = arith.constant 0 : i32
    %c0_i32_1 = arith.constant 0 : i32
    return %c0_i32, %c0_i32_0 : i32, i32
  }
  func.func @transform_3(%arg0: i32, %arg1: i32) -> (i32, i32) {
    %c0_i32 = arith.constant 0 : i32
    %c0_i32_0 = arith.constant 0 : i32
    %c0_i32_1 = arith.constant 0 : i32
    return %c0_i32, %c0_i32_0 : i32, i32
  }
  func.func @transform_4(%arg0: i32, %arg1: i32) -> (i32, i32) {
    %c0_i32 = arith.constant 0 : i32
    %c0_i32_0 = arith.constant 0 : i32
    %c0_i32_1 = arith.constant 0 : i32
    return %c0_i32, %c0_i32_0 : i32, i32
  }
  func.func @transform_5(%arg0: i32, %arg1: i32) -> (i32, i32, i32) {
    %c0_i32 = arith.constant 0 : i32
    %c0_i32_0 = arith.constant 0 : i32
    return %arg0, %arg1, %c0_i32 : i32, i32, i32
  }
}

</mosaic_0001>

<llo_original>
// kernel: tpu_custom_call.1
$region0: #{tpu_custom_call.1}
  #allocation0 [shape = 'u32[]', space=smem, size = 0x4, offset = 0x4, fixed_abs, tag = 'smem constant byte address 0x4 - core index']
  #allocation1 [shape = 'u32[144,128]{1,0:T(1,128)}', space=vmem, size = 0x12000, scoped, tag = 'internal scratch']
  #allocation2 [shape = 'f32[4,16,128]{2,1,0:T(8,128)}', space=vmem, size = 0x8000, scoped, tag = 'scratch operand']
  %s0 = inlined_call_operand.hbm [shape: bf16[2,16,16,36], index: 0, kind: input, shape index: {}]
  %s1 = inlined_call_operand.hbm [shape: bf16[36,128], index: 1, kind: input, shape index: {}]
  %s2 = inlined_call_operand.vmem [shape: f32[1,128], index: 2, kind: input, shape index: {}]
  %s3 = inlined_call_operand.vmem [shape: bf16[4,128], index: 3, kind: input, shape index: {}]
  %s4 = inlined_call_operand.vmem [shape: f32[1,128], index: 4, kind: input, shape index: {}]
  %s5 = inlined_call_operand.hbm [shape: f32[2,64,128], index: 5, kind: output, shape index: {}]
  %s6 = sld [smem:[#allocation0]]
  $region61: #{tpu_custom_call.1} parent=0
    _
  %s8 = ssub.s32 1, %s6
  %s9 = scalar_select 0, %s8, %s6
  $region1: #{tpu_custom_call.1} parent=0
    #allocation3 [shape = 'u8[65536]{0}', space=vmem, size = 0x10000, scoped, tag = 'input window, operand 0']
    #allocation4 [shape = 's32[2]{0}', space=sflag, size = 0x8, scoped, tag = 'scoped memory for tpu_custom_call.1']
    #allocation5 [shape = 's32[2]{0}', space=sflag, size = 0x8, scoped, tag = 'scoped memory for tpu_custom_call.1']
    #allocation6 [shape = 'u8[10240]{0}', space=vmem, size = 0x2800, scoped, tag = 'input window, operand 1, single buffered']
    #allocation7 [shape = 's32[1]{0}', space=sflag, size = 0x4, scoped, tag = 'scoped memory for tpu_custom_call.1']
    #allocation8 [shape = 'u8[32768]{0}', space=vmem, size = 0x8000, scoped, tag = 'output window, operand 0']
    %10 = vsyncpa [#allocation4], 0
    %s11 = scalar_lea.sflag [#allocation4], 1
    %12 = vsyncpa %s11, 0
    %13 = vsyncpa [#allocation7], 0
    %14 = vsyncpa [#allocation5], 0
    %s15 = scalar_lea.sflag [#allocation5], 1
    %16 = vsyncpa %s15, 0
    loop: start=0, step=1, limit=6
    $region2: #{tpu_custom_call.1} parent=1 // loop_pre_header
      _
    $region3: #{tpu_custom_call.1} parent=1 // loop_header
      %s18 = sphi 0, %s22
      %p19 = scmp.ge.s32.totalorder %s18, 6
      %s25 = sphi 0, %s37
      %s26 = sphi 0, %s33
      %s27 = sphi 0, %s25
      %s28 = sphi 0, %s26
      %s29 = sphi 0, %s27
      %s30 = sphi 0, %s28
      %s42 = sphi 0, %s44
      %s45 = sphi 0, %s42
      %s46 = sphi 0, %s45
      %s62 = sphi 0, %s46
      %s66 = sphi 0, %s66
      %s68 = sphi 0, %s66
      %s69 = sphi 0, %s68
      %s83 = sphi 0, %s69
      %s87 = sphi 0, %s87
      %s89 = sphi 0, %s87
      %s90 = sphi 0, %s89
      %s104 = sphi 0, %s90
      %s108 = sphi 0, %s108
      %s110 = sphi 0, %s108
      %s111 = sphi 0, %s110
      %s125 = sphi 0, %s111
      %s129 = sphi 0, %s129
      %s131 = sphi 0, %s129
      %s132 = sphi 0, %s131
      %s146 = sphi 0, %s132
      %s154 = sphi 0, %s156
      %s157 = sphi 0, %s154
      %s158 = sphi 0, %s157
      %s174 = sphi 0, %s158
    $region4: #{tpu_custom_call.1} parent=1 // loop_header_branch
      %21 = sbr.rel (%p19) target = $region8
    $region5: #{tpu_custom_call.1} parent=1 // loop_body
      %s23 = ssub.s32 %s18, 1
      %s24 = ssub.s32 %s18, 2
      %s31 = sadd.s32 1, %s26
      %p32 = scmp.ge.s32.totalorder %s31, 2
      %s33 = scalar_select %p32, 0, %s31
      %s34 = sadd.s32 1, %s25
      %s35 = scalar_select %p32, %s34, %s25
      %p36 = scmp.ge.s32.totalorder %s35, 2
      %s37 = scalar_select %p36, 0, %s35
      %s38 = ssub.s32 %s25, %s37
      %s39 = ssub.s32 %s26, %s33
      %s40 = sor.u32 %s38, %s39
      %p41 = scmp.eq.s32.totalorder %s40, 0
      %s43 = sadd.s32 %s42, 1
      %s44 = scalar_select %p41, %s42, %s43
      %p47 = pneg %p41
      %p48 = scmp.eq.s32.totalorder %s18, 3
      %p49 = por %p47, %p48
      %p50 = scmp.ne.s32.totalorder %s42, %s45
      %p51 = scmp.eq.s32.totalorder %s18, 0
      %p52 = por %p50, %p51
      %p53 = scmp.ne.s32.totalorder %s42, %s45
      %p54 = scmp.eq.s32.totalorder %s23, 3
      %p55 = por %p53, %p54
      %p56 = scmp.ne.s32.totalorder %s45, %s46
      %p57 = scmp.eq.s32.totalorder %s23, 0
      %p58 = por %p56, %p57
      %p59 = scmp.ne.s32.totalorder %s45, %s46
      %p60 = scmp.eq.s32.totalorder %s24, 3
      %p61 = por %p59, %p60
      %p63 = scmp.ne.s32.totalorder %s46, %s62
      %p64 = scmp.eq.s32.totalorder %s24, 0
      %p65 = por %p63, %p64
      %s67 = sadd.s32 %s66, 1
      %p70 = scmp.eq.s32.totalorder %s18, 3
      %p71 = scmp.ne.s32.totalorder %s66, %s68
      %p72 = scmp.eq.s32.totalorder %s18, 0
      %p73 = por %p71, %p72
      %p74 = scmp.ne.s32.totalorder %s66, %s68
      %p75 = scmp.eq.s32.totalorder %s23, 3
      %p76 = por %p74, %p75
      %p77 = scmp.ne.s32.totalorder %s68, %s69
      %p78 = scmp.eq.s32.totalorder %s23, 0
      %p79 = por %p77, %p78
      %p80 = scmp.ne.s32.totalorder %s68, %s69
      %p81 = scmp.eq.s32.totalorder %s24, 3
      %p82 = por %p80, %p81
      %p84 = scmp.ne.s32.totalorder %s69, %s83
      %p85 = scmp.eq.s32.totalorder %s24, 0
      %p86 = por %p84, %p85
      %s88 = sadd.s32 %s87, 1
      %p91 = scmp.eq.s32.totalorder %s18, 3
      %p92 = scmp.ne.s32.totalorder %s87, %s89
      %p93 = scmp.eq.s32.totalorder %s18, 0
      %p94 = por %p92, %p93
      %p95 = scmp.ne.s32.totalorder %s87, %s89
      %p96 = scmp.eq.s32.totalorder %s23, 3
      %p97 = por %p95, %p96
      %p98 = scmp.ne.s32.totalorder %s89, %s90
      %p99 = scmp.eq.s32.totalorder %s23, 0
      %p100 = por %p98, %p99
      %p101 = scmp.ne.s32.totalorder %s89, %s90
      %p102 = scmp.eq.s32.totalorder %s24, 3
      %p103 = por %p101, %p102
      %p105 = scmp.ne.s32.totalorder %s90, %s104
      %p106 = scmp.eq.s32.totalorder %s24, 0
      %p107 = por %p105, %p106
      %s109 = sadd.s32 %s108, 1
      %p112 = scmp.eq.s32.totalorder %s18, 3
      %p113 = scmp.ne.s32.totalorder %s108, %s110
      %p114 = scmp.eq.s32.totalorder %s18, 0
      %p115 = por %p113, %p114
      %p116 = scmp.ne.s32.totalorder %s108, %s110
      %p117 = scmp.eq.s32.totalorder %s23, 3
      %p118 = por %p116, %p117
      %p119 = scmp.ne.s32.totalorder %s110, %s111
      %p120 = scmp.eq.s32.totalorder %s23, 0
      %p121 = por %p119, %p120
      %p122 = scmp.ne.s32.totalorder %s110, %s111
      %p123 = scmp.eq.s32.totalorder %s24, 3
      %p124 = por %p122, %p123
      %p126 = scmp.ne.s32.totalorder %s111, %s125
      %p127 = scmp.eq.s32.totalorder %s24, 0
      %p128 = por %p126, %p127
      %s130 = sadd.s32 %s129, 1
      %p133 = scmp.eq.s32.totalorder %s18, 3
      %p134 = scmp.ne.s32.totalorder %s129, %s131
      %p135 = scmp.eq.s32.totalorder %s18, 0
      %p136 = por %p134, %p135
      %p137 = scmp.ne.s32.totalorder %s129, %s131
      %p138 = scmp.eq.s32.totalorder %s23, 3
      %p139 = por %p137, %p138
      %p140 = scmp.ne.s32.totalorder %s131, %s132
      %p141 = scmp.eq.s32.totalorder %s23, 0
      %p142 = por %p140, %p141
      %p143 = scmp.ne.s32.totalorder %s131, %s132
      %p144 = scmp.eq.s32.totalorder %s24, 3
      %p145 = por %p143, %p144
      %p147 = scmp.ne.s32.totalorder %s132, %s146
      %p148 = scmp.eq.s32.totalorder %s24, 0
      %p149 = por %p147, %p148
      %s150 = ssub.s32 %s25, %s37
      %s151 = ssub.s32 %s26, %s33
      %s152 = sor.u32 %s150, %s151
      %p153 = scmp.eq.s32.totalorder %s152, 0
      %s155 = sadd.s32 %s154, 1
      %s156 = scalar_select %p153, %s154, %s155
      %p159 = pneg %p153
      %p160 = scmp.eq.s32.totalorder %s18, 3
      %p161 = por %p159, %p160
      %p162 = scmp.ne.s32.totalorder %s154, %s157
      %p163 = scmp.eq.s32.totalorder %s18, 0
      %p164 = por %p162, %p163
      %p165 = scmp.ne.s32.totalorder %s154, %s157
      %p166 = scmp.eq.s32.totalorder %s23, 3
      %p167 = por %p165, %p166
      %p168 = scmp.ne.s32.totalorder %s157, %s158
      %p169 = scmp.eq.s32.totalorder %s23, 0
      %p170 = por %p168, %p169
      %p171 = scmp.ne.s32.totalorder %s157, %s158
      %p172 = scmp.eq.s32.totalorder %s24, 3
      %p173 = por %p171, %p172
      %p175 = scmp.ne.s32.totalorder %s158, %s174
      %p176 = scmp.eq.s32.totalorder %s24, 0
      %p177 = por %p175, %p176
      %p178 = scmp.le.s32.totalorder 1, %s18
      %p179 = scmp.lt.s32.totalorder %s18, 5
      %p180 = pnand %p178, %p179
      %p181 = pneg %p180
      // Predicated region
      $region9: #{tpu_custom_call.1} parent=5 // pred_check
        _
      $region10: #{tpu_custom_call.1} parent=5 // pred_check_branch
        %183 = sbr.rel (%p180) target = $region12
      $region11: #{tpu_custom_call.1} parent=5 // pred_region
        %s184 = ssub.s32 %s18, 1
        // Predicated region
        $region13: #{tpu_custom_call.1} parent=11 // pred_check
          %p185 = pneg %p79
        $region14: #{tpu_custom_call.1} parent=11 // pred_check_branch
          %187 = sbr.rel (%p185) target = $region16
        $region15: #{tpu_custom_call.1} parent=11 // pred_region
          %s189 = ssub.s32 320, 320
          %190 = vsyncadd [#allocation7], %s189
          %s191 = sshll.u32 [#allocation6], 4
          %s192 = int_to_ptr.vmem [resolvable:$true] %s191
          %197 = dma.hbm_to_vmem [thread:$0]  %s1, 320, %s192, [#allocation7], 64, 64, 4
        $region16: #{tpu_custom_call.1} parent=11 // pred_fallthru
          _
        // Predicated region
        $region17: #{tpu_custom_call.1} parent=11 // pred_check
          %p198 = pneg %p100
        $region18: #{tpu_custom_call.1} parent=11 // pred_check_branch
          %200 = sbr.rel (%p198) target = $region20
        $region19: #{tpu_custom_call.1} parent=11 // pred_region
          _
        $region20: #{tpu_custom_call.1} parent=11 // pred_fallthru
          _
        // Predicated region
        $region21: #{tpu_custom_call.1} parent=11 // pred_check
          %p201 = pneg %p121
        $region22: #{tpu_custom_call.1} parent=11 // pred_check_branch
          %203 = sbr.rel (%p201) target = $region24
        $region23: #{tpu_custom_call.1} parent=11 // pred_region
          _
        $region24: #{tpu_custom_call.1} parent=11 // pred_fallthru
          _
        // Predicated region
        $region25: #{tpu_custom_call.1} parent=11 // pred_check
          %p204 = pneg %p142
        $region26: #{tpu_custom_call.1} parent=11 // pred_check_branch
          %206 = sbr.rel (%p204) target = $region28
        $region27: #{tpu_custom_call.1} parent=11 // pred_region
          _
        $region28: #{tpu_custom_call.1} parent=11 // pred_fallthru
          _
      $region12: #{tpu_custom_call.1} parent=5 // pred_fallthru
        _
      %p207 = scmp.lt.s32.totalorder %s18, 4
      // Predicated region
      $region29: #{tpu_custom_call.1} parent=5 // pred_check
        %p208 = pneg %p207
      $region30: #{tpu_custom_call.1} parent=5 // pred_check_branch
        %210 = sbr.rel (%p208) target = $region32
      $region31: #{tpu_custom_call.1} parent=5 // pred_region
        // Predicated region
        $region33: #{tpu_custom_call.1} parent=31 // pred_check
          %p211 = pneg %p52
        $region34: #{tpu_custom_call.1} parent=31 // pred_check_branch
          %213 = sbr.rel (%p211) target = $region36
        $region35: #{tpu_custom_call.1} parent=31 // pred_region
          %s214 = sand.u32 %s42, 1
          %s215 = scalar_lea.sflag [#allocation4], %s214
          %s216 = sand.u32 %s42, 1
          %s217 = smul.addr %s216, 64
          %s218 = scalar_lea.vmem [#allocation3], %s217
          %s219 = smul.u32 8, %s26
          %s221 = ssub.s32 1024, 1024
          %222 = vsyncadd %s215, %s221
          %s223 = smul.addr %s219, 2
          %s224 = smul.addr %s25, 32
          %s225 = sadd.s32 %s223, %s224
          %s226 = smul.addr %s225, 64
          %s227 = scalar_lea.hbm %s0, %s226
          %s228 = sshll.u32 %s218, 4
          %s229 = int_to_ptr.vmem [resolvable:$true] %s228
          %234 = dma.hbm_to_vmem [thread:$0]  %s227, 1024, %s229, %s215, 64, 64, 4
        $region36: #{tpu_custom_call.1} parent=31 // pred_fallthru
          _
      $region32: #{tpu_custom_call.1} parent=5 // pred_fallthru
        _
      %p235 = scmp.le.s32.totalorder 1, %s18
      %p236 = scmp.lt.s32.totalorder %s18, 5
      %p237 = pnand %p235, %p236
      %p238 = pneg %p237
      // Predicated region
      $region37: #{tpu_custom_call.1} parent=5 // pred_check
        _
      $region38: #{tpu_custom_call.1} parent=5 // pred_check_branch
        %240 = sbr.rel (%p237) target = $region40
      $region39: #{tpu_custom_call.1} parent=5 // pred_region
        %s241 = ssub.s32 %s18, 1
        %s242 = sand.u32 %s45, 1
        %s243 = scalar_lea.sflag [#allocation4], %s242
        %s244 = sand.u32 %s45, 1
        %s245 = smul.addr %s244, 64
        %s246 = scalar_lea.vmem [#allocation3], %s245
        // Predicated region
        $region41: #{tpu_custom_call.1} parent=39 // pred_check
          %p247 = pneg %p58
        $region42: #{tpu_custom_call.1} parent=39 // pred_check_branch
          %249 = sbr.rel (%p247) target = $region44
        $region43: #{tpu_custom_call.1} parent=39 // pred_region
          %250 = dma.done %s243, 1024
        $region44: #{tpu_custom_call.1} parent=39 // pred_fallthru
          _
        // Predicated region
        $region45: #{tpu_custom_call.1} parent=39 // pred_check
          %p251 = pneg %p79
        $region46: #{tpu_custom_call.1} parent=39 // pred_check_branch
          %253 = sbr.rel (%p251) target = $region48
        $region47: #{tpu_custom_call.1} parent=39 // pred_region
          %254 = dma.done [#allocation7], 320
        $region48: #{tpu_custom_call.1} parent=39 // pred_fallthru
          _
        %s255 = sand.u32 %s45, 1
        %s256 = scalar_lea.sflag [#allocation4], %s255
        %s257 = sand.u32 %s45, 1
        %s258 = smul.addr %s257, 64
        %s259 = scalar_lea.vmem [#allocation3], %s258
        %p260 = pneg %p58
        %p261 = pneg %p55
        %p262 = pneg %p79
        %p263 = pneg %p76
        %p264 = pneg %p100
        %p265 = pneg %p97
        %p266 = pneg %p121
        %p267 = pneg %p118
        %p268 = pneg %p142
        %p269 = pneg %p139
        %p270 = pneg %p170
        %p271 = pneg %p167
        %s272 = sand.u32 %s157, 1
        %s273 = scalar_lea.sflag [#allocation5], %s272
        %s274 = sand.u32 %s157, 1
        %s275 = smul.addr %s274, 32
        %s276 = scalar_lea.vmem [#allocation8], %s275
        %s277 = smul.u32 8, %s28
        %s278 = smul.u32 4, %s28
        %v280 = vld [vmem:[%s246] sm:$0xf]
        %v281 = vld [vmem:[%s246 + $0x4] sm:$0xf]
        %v282 = vld [vmem:[%s246 + $0x8] sm:$0xf]
        %v283 = vld [vmem:[%s246 + $0xc] sm:$0xf]
        %v284 = vld [vmem:[%s246 + $0x10] sm:$0xf]
        %v285 = vld [vmem:[%s246 + $0x14] sm:$0xf]
        %v286 = vld [vmem:[%s246 + $0x18] sm:$0xf]
        %v287 = vld [vmem:[%s246 + $0x1c] sm:$0xf]
        %v288 = vld [vmem:[%s246 + $0x20] sm:$0xf]
        %v289 = vld [vmem:[%s246 + $0x24] sm:$0xf]
        %v290 = vld [vmem:[%s246 + $0x28] sm:$0xf]
        %v291 = vld [vmem:[%s246 + $0x2c] sm:$0xf]
        %v292 = vld [vmem:[%s246 + $0x30] sm:$0xf]
        %v293 = vld [vmem:[%s246 + $0x34] sm:$0xf]
        %v294 = vld [vmem:[%s246 + $0x38] sm:$0xf]
        %v295 = vld [vmem:[%s246 + $0x3c] sm:$0xf]
        %v296 = vld [vmem:[#allocation6] sm:$0xf]
        %v297 = vld [vmem:[#allocation6 + $0x4] sm:$0xf]
        %v298 = vld [vmem:[#allocation6 + $0x8] sm:$0xf]
        %v299 = vld [vmem:[#allocation6 + $0xc] sm:$0xf]
        %v300 = vld [vmem:[#allocation6 + $0x10] sm:$0x3]
        %v301 = vld [vmem:[%s2] sm:$0x1]
        %v303 = vlaneseq
        %v304 = vshrl.u32 %v303, 7
        %v305 = vsub.s32 0, %v304
        %v306 = vrot.slane %v301, %v305
        %v324 = vunpack.c.l.b16 %v280
        %v325 = vunpack.c.l.b16 %v281
        %v326 = vunpack.c.l.b16 %v282
        %v327 = vunpack.c.l.b16 %v283
        %v328 = vunpack.c.l.b16 %v284
        %v329 = vunpack.c.l.b16 %v285
        %v330 = vunpack.c.l.b16 %v286
        %v331 = vunpack.c.l.b16 %v287
        %v332 = vunpack.c.l.b16 %v288
        %v333 = vunpack.c.l.b16 %v289
        %v334 = vunpack.c.l.b16 %v290
        %v335 = vunpack.c.l.b16 %v291
        %v336 = vunpack.c.l.b16 %v292
        %v337 = vunpack.c.l.b16 %v293
        %v338 = vunpack.c.l.b16 %v294
        %v339 = vunpack.c.l.b16 %v295
        %v340 = vpack.c.b16 %v325, %v324
        %v341 = vpack.c.b16 %v327, %v326
        %v342 = vpack.c.b16 %v329, %v328
        %v343 = vpack.c.b16 %v331, %v330
        %v344 = vpack.c.b16 %v333, %v332
        %v345 = vpack.c.b16 %v335, %v334
        %v346 = vpack.c.b16 %v337, %v336
        %v347 = vpack.c.b16 %v339, %v338
        %v353 = vunpack.c.l.b16 %v296
        %v354 = vunpack.c.l.b16 %v297
        %v355 = vunpack.c.l.b16 %v298
        %v356 = vunpack.c.l.b16 %v299
        %v357 = vunpack.c.l.b16 %v300
        %v358 = vpack.c.b16 %v354, %v353
        %v359 = vpack.c.b16 %v356, %v355
        %v360 = vpack.c.b16 %v357, %v357
        %vm363 = vcmask 293888
        %v365 = vsel %vm363, %v340, 0
        %v368 = vsel %vm363, %v341, 0
        %v371 = vsel %vm363, %v342, 0
        %v374 = vsel %vm363, %v343, 0
        %v377 = vsel %vm363, %v344, 0
        %v380 = vsel %vm363, %v345, 0
        %v383 = vsel %vm363, %v346, 0
        %v386 = vsel %vm363, %v347, 0
        %vm388 = vcmask 1041408
        %v390 = vsel %vm388, %v360, 0
        %392 = vmatprep.subr.bf16.mxu0 0
        %393 = vmatpush1.bf16.msra.mxu0 0
        %394 = vmatprep.subr.bf16.mxu0 0
        %395 = vmatpush1.bf16.msra.mxu0 0
        %396 = vmatprep.subr.bf16.mxu0 0
        %397 = vmatpush1.bf16.msra.mxu0 0
        %398 = vmatprep.subr.bf16.mxu0 0
        %399 = vmatpush1.bf16.msra.mxu0 0
        %400 = vmatprep.subr.bf16.mxu0 0
        %401 = vmatpush1.bf16.msra.mxu0 0
        %402 = vmatprep.subr.bf16.mxu0 0
        %403 = vmatpush1.bf16.msra.mxu0 %v390
        %404 = vmatprep.subr.bf16.mxu0 0
        %405 = vmatpush1.bf16.msra.mxu0 %v359
        %406 = vmatprep.subr.bf16.mxu0 0
        %407 = vmatpush1.bf16.msra.mxu0 %v358
        %408 = vmatprep.subr.bf16.mxu0 0
        %409 = vmatpush2.bf16.msra.mxu0 0
        %410 = vmatprep.subr.bf16.mxu0 0
        %411 = vmatpush2.bf16.msra.mxu0 0
        %412 = vmatprep.subr.bf16.mxu0 0
        %413 = vmatpush2.bf16.msra.mxu0 0
        %414 = vmatprep.subr.bf16.mxu0 0
        %415 = vmatpush2.bf16.msra.mxu0 0
        %416 = vmatprep.subr.bf16.mxu0 0
        %417 = vmatpush2.bf16.msra.mxu0 0
        %418 = vmatprep.subr.bf16.mxu0 0
        %419 = vmatpush2.bf16.msra.mxu0 0
        %420 = vmatprep.subr.bf16.mxu0 0
        %421 = vmatpush2.bf16.msra.mxu0 0
        %422 = vmatprep.subr.bf16.mxu0 0
        %423 = vmatpush2.bf16.msra.mxu0 0
        %424 = vmatprep.mubr.bf16.mxu0 0
        %425 = vmatmul.mubr.bf16.gmra.mxu0 %v365
        %v426 = vpop.f32.mrf.mxu0
        %v427 = vadd.f32 %v306, %v426
        %v428 = vpop.f32.mrf.mxu0
        %v429 = vpop.f32.mrf.mxu0
        %v430 = vadd.f32 %v306, %v429
        %v431 = vpop.f32.mrf.mxu0
        %432 = vmatprep.mubr.bf16.mxu0 0
        %433 = vmatmul.mubr.bf16.gmra.mxu0 %v368
        %v434 = vpop.f32.mrf.mxu0
        %v435 = vadd.f32 %v306, %v434
        %v436 = vpop.f32.mrf.mxu0
        %v437 = vpop.f32.mrf.mxu0
        %v438 = vadd.f32 %v306, %v437
        %v439 = vpop.f32.mrf.mxu0
        %440 = vmatprep.mubr.bf16.mxu0 0
        %441 = vmatmul.mubr.bf16.gmra.mxu0 %v371
        %v442 = vpop.f32.mrf.mxu0
        %v443 = vadd.f32 %v306, %v442
        %v444 = vpop.f32.mrf.mxu0
        %v445 = vpop.f32.mrf.mxu0
        %v446 = vadd.f32 %v306, %v445
        %v447 = vpop.f32.mrf.mxu0
        %448 = vmatprep.mubr.bf16.mxu0 0
        %449 = vmatmul.mubr.bf16.gmra.mxu0 %v374
        %v450 = vpop.f32.mrf.mxu0
        %v451 = vadd.f32 %v306, %v450
        %v452 = vpop.f32.mrf.mxu0
        %v453 = vpop.f32.mrf.mxu0
        %v454 = vadd.f32 %v306, %v453
        %v455 = vpop.f32.mrf.mxu0
        %456 = vmatprep.mubr.bf16.mxu0 0
        %457 = vmatmul.mubr.bf16.gmra.mxu0 %v377
        %v458 = vpop.f32.mrf.mxu0
        %v459 = vadd.f32 %v306, %v458
        %v460 = vpop.f32.mrf.mxu0
        %v461 = vpop.f32.mrf.mxu0
        %v462 = vadd.f32 %v306, %v461
        %v463 = vpop.f32.mrf.mxu0
        %464 = vmatprep.mubr.bf16.mxu0 0
        %465 = vmatmul.mubr.bf16.gmra.mxu0 %v380
        %v466 = vpop.f32.mrf.mxu0
        %v467 = vadd.f32 %v306, %v466
        %v468 = vpop.f32.mrf.mxu0
        %v469 = vpop.f32.mrf.mxu0
        %v470 = vadd.f32 %v306, %v469
        %v471 = vpop.f32.mrf.mxu0
        %472 = vmatprep.mubr.bf16.mxu0 0
        %473 = vmatmul.mubr.bf16.gmra.mxu0 %v383
        %v474 = vpop.f32.mrf.mxu0
        %v475 = vadd.f32 %v306, %v474
        %v476 = vpop.f32.mrf.mxu0
        %v477 = vpop.f32.mrf.mxu0
        %v478 = vadd.f32 %v306, %v477
        %v479 = vpop.f32.mrf.mxu0
        %480 = vmatprep.mubr.bf16.mxu0 0
        %481 = vmatmul.mubr.bf16.gmra.mxu0 %v386
        %v482 = vpop.f32.mrf.mxu0
        %v483 = vadd.f32 %v306, %v482
        %v484 = vpop.f32.mrf.mxu0
        %v485 = vpop.f32.mrf.mxu0
        %v486 = vadd.f32 %v306, %v485
        %v487 = vpop.f32.mrf.mxu0
        %488 = vdwg.mxu0
        %v489 = vmax.f32 %v427, 0.0
        %v490 = vmax.f32 %v430, 0.0
        %v491 = vmax.f32 %v435, 0.0
        %v492 = vmax.f32 %v438, 0.0
        %v493 = vmax.f32 %v443, 0.0
        %v494 = vmax.f32 %v446, 0.0
        %v495 = vmax.f32 %v451, 0.0
        %v496 = vmax.f32 %v454, 0.0
        %v497 = vmax.f32 %v459, 0.0
        %v498 = vmax.f32 %v462, 0.0
        %v499 = vmax.f32 %v467, 0.0
        %v500 = vmax.f32 %v470, 0.0
        %v501 = vmax.f32 %v475, 0.0
        %v502 = vmax.f32 %v478, 0.0
        %v503 = vmax.f32 %v483, 0.0
        %v504 = vmax.f32 %v486, 0.0
        %v505 = vld [vmem:[%s3] sm:$0x3]
        %vm506 = vcmask 31744
        %v507 = vsel %vm506, %v340, 0
        %v509 = vsel %vm506, %v341, 0
        %v511 = vsel %vm506, %v342, 0
        %v513 = vsel %vm506, %v343, 0
        %v515 = vsel %vm506, %v344, 0
        %v517 = vsel %vm506, %v345, 0
        %v519 = vsel %vm506, %v346, 0
        %v521 = vsel %vm506, %v347, 0
        %v524 = vsel %vm388, %v505, 0
        %526 = vmatprep.subr.bf16.mxu0 0
        %527 = vmatpush1.bf16.msra.mxu0 0
        %528 = vmatprep.subr.bf16.mxu0 0
        %529 = vmatpush1.bf16.msra.mxu0 0
        %530 = vmatprep.subr.bf16.mxu0 0
        %531 = vmatpush1.bf16.msra.mxu0 0
        %532 = vmatprep.subr.bf16.mxu0 0
        %533 = vmatpush1.bf16.msra.mxu0 0
        %534 = vmatprep.subr.bf16.mxu0 0
        %535 = vmatpush1.bf16.msra.mxu0 0
        %536 = vmatprep.subr.bf16.mxu0 0
        %537 = vmatpush1.bf16.msra.mxu0 0
        %538 = vmatprep.subr.bf16.mxu0 0
        %539 = vmatpush1.bf16.msra.mxu0 0
        %540 = vmatprep.subr.bf16.mxu0 0
        %541 = vmatpush1.bf16.msra.mxu0 %v524
        %542 = vmatprep.subr.bf16.mxu0 0
        %543 = vmatpush2.bf16.msra.mxu0 0
        %544 = vmatprep.subr.bf16.mxu0 0
        %545 = vmatpush2.bf16.msra.mxu0 0
        %546 = vmatprep.subr.bf16.mxu0 0
        %547 = vmatpush2.bf16.msra.mxu0 0
        %548 = vmatprep.subr.bf16.mxu0 0
        %549 = vmatpush2.bf16.msra.mxu0 0
        %550 = vmatprep.subr.bf16.mxu0 0
        %551 = vmatpush2.bf16.msra.mxu0 0
        %552 = vmatprep.subr.bf16.mxu0 0
        %553 = vmatpush2.bf16.msra.mxu0 0
        %554 = vmatprep.subr.bf16.mxu0 0
        %555 = vmatpush2.bf16.msra.mxu0 0
        %556 = vmatprep.subr.bf16.mxu0 0
        %557 = vmatpush2.bf16.msra.mxu0 0
        %558 = vmatprep.mubr.bf16.mxu0 0
        %559 = vmatmul.mubr.bf16.gmra.mxu0 %v507
        %v560 = vpop.f32.mrf.mxu0
        %v561 = vadd.f32 0.0, %v560
        %v562 = vpop.f32.mrf.mxu0
        %v563 = vpop.f32.mrf.mxu0
        %v564 = vadd.f32 0.0, %v563
        %v565 = vpop.f32.mrf.mxu0
        %566 = vmatprep.mubr.bf16.mxu0 0
        %567 = vmatmul.mubr.bf16.gmra.mxu0 %v509
        %v568 = vpop.f32.mrf.mxu0
        %v569 = vadd.f32 0.0, %v568
        %v570 = vpop.f32.mrf.mxu0
        %v571 = vpop.f32.mrf.mxu0
        %v572 = vadd.f32 0.0, %v571
        %v573 = vpop.f32.mrf.mxu0
        %574 = vmatprep.mubr.bf16.mxu0 0
        %575 = vmatmul.mubr.bf16.gmra.mxu0 %v511
        %v576 = vpop.f32.mrf.mxu0
        %v577 = vadd.f32 0.0, %v576
        %v578 = vpop.f32.mrf.mxu0
        %v579 = vpop.f32.mrf.mxu0
        %v580 = vadd.f32 0.0, %v579
        %v581 = vpop.f32.mrf.mxu0
        %582 = vmatprep.mubr.bf16.mxu0 0
        %583 = vmatmul.mubr.bf16.gmra.mxu0 %v513
        %v584 = vpop.f32.mrf.mxu0
        %v585 = vadd.f32 0.0, %v584
        %v586 = vpop.f32.mrf.mxu0
        %v587 = vpop.f32.mrf.mxu0
        %v588 = vadd.f32 0.0, %v587
        %v589 = vpop.f32.mrf.mxu0
        %590 = vmatprep.mubr.bf16.mxu0 0
        %591 = vmatmul.mubr.bf16.gmra.mxu0 %v515
        %v592 = vpop.f32.mrf.mxu0
        %v593 = vadd.f32 0.0, %v592
        %v594 = vpop.f32.mrf.mxu0
        %v595 = vpop.f32.mrf.mxu0
        %v596 = vadd.f32 0.0, %v595
        %v597 = vpop.f32.mrf.mxu0
        %598 = vmatprep.mubr.bf16.mxu0 0
        %599 = vmatmul.mubr.bf16.gmra.mxu0 %v517
        %v600 = vpop.f32.mrf.mxu0
        %v601 = vadd.f32 0.0, %v600
        %v602 = vpop.f32.mrf.mxu0
        %v603 = vpop.f32.mrf.mxu0
        %v604 = vadd.f32 0.0, %v603
        %v605 = vpop.f32.mrf.mxu0
        %606 = vmatprep.mubr.bf16.mxu0 0
        %607 = vmatmul.mubr.bf16.gmra.mxu0 %v519
        %v608 = vpop.f32.mrf.mxu0
        %v609 = vadd.f32 0.0, %v608
        %v610 = vpop.f32.mrf.mxu0
        %v611 = vpop.f32.mrf.mxu0
        %v612 = vadd.f32 0.0, %v611
        %v613 = vpop.f32.mrf.mxu0
        %614 = vmatprep.mubr.bf16.mxu0 0
        %615 = vmatmul.mubr.bf16.gmra.mxu0 %v521
        %v616 = vpop.f32.mrf.mxu0
        %v617 = vadd.f32 0.0, %v616
        %v618 = vpop.f32.mrf.mxu0
        %v619 = vpop.f32.mrf.mxu0
        %v620 = vadd.f32 0.0, %v619
        %v621 = vpop.f32.mrf.mxu0
        %622 = vdwg.mxu0
        %v623 = vadd.f32 %v489, %v561
        %v624 = vadd.f32 %v490, %v564
        %v625 = vadd.f32 %v491, %v569
        %v626 = vadd.f32 %v492, %v572
        %v627 = vadd.f32 %v493, %v577
        %v628 = vadd.f32 %v494, %v580
        %v629 = vadd.f32 %v495, %v585
        %v630 = vadd.f32 %v496, %v588
        %v631 = vadd.f32 %v497, %v593
        %v632 = vadd.f32 %v498, %v596
        %v633 = vadd.f32 %v499, %v601
        %v634 = vadd.f32 %v500, %v604
        %v635 = vadd.f32 %v501, %v609
        %v636 = vadd.f32 %v502, %v612
        %v637 = vadd.f32 %v503, %v617
        %v638 = vadd.f32 %v504, %v620
        %v639 = vadd.f32 %v623, %v625
        %v640 = vadd.f32 %v624, %v626
        %v641 = vadd.f32 %v627, %v629
        %v642 = vadd.f32 %v628, %v630
        %v643 = vadd.f32 %v631, %v633
        %v644 = vadd.f32 %v632, %v634
        %v645 = vadd.f32 %v635, %v637
        %v646 = vadd.f32 %v636, %v638
        %647 = vst [vmem:[#allocation2] sm:$0xff] %v639
        %648 = vst [vmem:[#allocation2 + $0x8] sm:$0xff] %v640
        %649 = vst [vmem:[#allocation2 + $0x10] sm:$0xff] %v641
        %650 = vst [vmem:[#allocation2 + $0x18] sm:$0xff] %v642
        %651 = vst [vmem:[#allocation2 + $0x20] sm:$0xff] %v643
        %652 = vst [vmem:[#allocation2 + $0x28] sm:$0xff] %v644
        %653 = vst [vmem:[#allocation2 + $0x30] sm:$0xff] %v645
        %654 = vst [vmem:[#allocation2 + $0x38] sm:$0xff] %v646
        %v655 = vld [vmem:[#allocation2] ss:$2 sm:$0xff]
        %s656 = scalar_lea.vmem [#allocation2], 16
        %v657 = vld [vmem:[%s656] ss:$2 sm:$0xff]
        %s658 = scalar_lea.vmem [#allocation2], 32
        %v659 = vld [vmem:[%s658] ss:$2 sm:$0xff]
        %s660 = scalar_lea.vmem [#allocation2], 48
        %v661 = vld [vmem:[%s660] ss:$2 sm:$0xff]
        %s662 = scalar_lea.vmem [#allocation2], 1
        %v663 = vld [vmem:[%s662] ss:$2 sm:$0xff]
        %s664 = scalar_lea.vmem [#allocation2], 17
        %v665 = vld [vmem:[%s664] ss:$2 sm:$0xff]
        %s666 = scalar_lea.vmem [#allocation2], 33
        %v667 = vld [vmem:[%s666] ss:$2 sm:$0xff]
        %s668 = scalar_lea.vmem [#allocation2], 49
        %v669 = vld [vmem:[%s668] ss:$2 sm:$0xff]
        %v670 = vadd.f32 %v655, %v663
        %v671 = vadd.f32 %v657, %v665
        %v672 = vadd.f32 %v659, %v667
        %v673 = vadd.f32 %v661, %v669
        %v674 = vmul.f32 %v670, 0.25
        %v675 = vmul.f32 %v671, 0.25
        %v676 = vmul.f32 %v672, 0.25
        %v677 = vmul.f32 %v673, 0.25
        %v678 = vld [vmem:[%s4] sm:$0x1]
        %v680 = vlaneseq
        %v681 = vshrl.u32 %v680, 7
        %v682 = vsub.s32 0, %v681
        %v683 = vrot.slane %v678, %v682
        %v685 = vadd.f32 %v674, %v683
        %v686 = vadd.f32 %v675, %v683
        %v687 = vadd.f32 %v676, %v683
        %v688 = vadd.f32 %v677, %v683
        %689 = vst [vmem:[%s276] sm:$0xff] %v685
        %690 = vst [vmem:[%s276 + $0x8] sm:$0xff] %v686
        %691 = vst [vmem:[%s276 + $0x10] sm:$0xff] %v687
        %692 = vst [vmem:[%s276 + $0x18] sm:$0xff] %v688
        %s693 = sand.u32 %s157, 1
        %s694 = scalar_lea.sflag [#allocation5], %s693
        %s695 = sand.u32 %s157, 1
        %s696 = smul.addr %s695, 32
        %s697 = scalar_lea.vmem [#allocation8], %s696
        // Predicated region
        $region49: #{tpu_custom_call.1} parent=39 // pred_check
          %p698 = pneg %p167
        $region50: #{tpu_custom_call.1} parent=39 // pred_check_branch
          %700 = sbr.rel (%p698) target = $region52
        $region51: #{tpu_custom_call.1} parent=39 // pred_region
          %s701 = smul.u32 4, %s28
          %s703 = ssub.s32 512, 512
          %704 = vsyncadd %s694, %s703
          %s705 = smul.addr %s27, 8
          %s706 = sadd.s32 %s701, %s705
          %s707 = smul.addr %s706, 128
          %s708 = scalar_lea.hbm %s5, %s707
          %s709 = sshll.u32 %s697, 4
          %s710 = int_to_ptr.vmem [resolvable:$true] %s709
          %715 = dma.vmem_to_hbm [thread:$0]  %s710, 512, %s708, %s694, 128, 128, 8
        $region52: #{tpu_custom_call.1} parent=39 // pred_fallthru
          _
      $region40: #{tpu_custom_call.1} parent=5 // pred_fallthru
        _
      %p716 = scmp.le.s32.totalorder 2, %s18
      // Predicated region
      $region53: #{tpu_custom_call.1} parent=5 // pred_check
        %p717 = pneg %p716
      $region54: #{tpu_custom_call.1} parent=5 // pred_check_branch
        %719 = sbr.rel (%p717) target = $region56
      $region55: #{tpu_custom_call.1} parent=5 // pred_region
        %s720 = ssub.s32 %s18, 2
        // Predicated region
        $region57: #{tpu_custom_call.1} parent=55 // pred_check
          %p721 = pneg %p173
        $region58: #{tpu_custom_call.1} parent=55 // pred_check_branch
          %723 = sbr.rel (%p721) target = $region60
        $region59: #{tpu_custom_call.1} parent=55 // pred_region
          %s724 = sand.u32 %s158, 1
          %s725 = scalar_lea.sflag [#allocation5], %s724
          %s726 = sand.u32 %s158, 1
          %s727 = smul.addr %s726, 32
          %s728 = scalar_lea.vmem [#allocation8], %s727
          %729 = dma.done %s725, 512
        $region60: #{tpu_custom_call.1} parent=55 // pred_fallthru
          _
      $region56: #{tpu_custom_call.1} parent=5 // pred_fallthru
        _
    $region6: #{tpu_custom_call.1} parent=1 // loop_footer
      %s22 = sadd.s32 1, %s18
    $region7: #{tpu_custom_call.1} parent=1 // loop_footer_branch
      %17 = sbr.rel target = $region3
    $region8: #{tpu_custom_call.1} parent=1 // loop_exit
      _
    %730 = vsyncpa [#allocation4], 1
    %s731 = scalar_lea.sflag [#allocation4], 1
    %732 = vsyncpa %s731, 1
    %733 = vsyncpa [#allocation7], 1
    %734 = vsyncpa [#allocation5], 1
    %s735 = scalar_lea.sflag [#allocation5], 1
    %736 = vsyncpa %s735, 1

</llo_original>
